<compile_context>
chip_gen: v5e
topology: v5e:2x2
jax: 0.10.0
libtpu: 0.0.40
codegen_flags: <defaults>
</compile_context>

<pallas_src>
import functools

import jax
import jax.numpy as jnp
from jax.experimental import pallas as pl
from jax.experimental.pallas import tpu as pltpu


def _round_up(n, m):
    return ((n + m - 1) // m) * m


# ---------------------------------------------------------------------------
# Kernel: one batch tile of  y = relu(x @ W1 + b1) @ W2 + b2
# ---------------------------------------------------------------------------
def two_layer_kernel(x_ref, w1_ref, b1_ref, w2_ref, b2_ref, y_ref):
    # x_ref:  [TB, D_in]   f32   (cast to bf16 on the VPU: free under DMA/MXU and
    #                            avoids a separate wrapper-side HBM cast pass)
    # w1_ref: [D_in, H1]   bf16      b1_ref: [1, H1]     f32
    # w2_ref: [H1, N_pad]  bf16      b2_ref: [1, N_pad]  f32
    # y_ref:  [TB, N_pad]  f32   (lane-dense: N_pad % 128 == 0)
    x_bf = x_ref[...].astype(jnp.bfloat16)
    h = jnp.dot(x_bf, w1_ref[...], preferred_element_type=jnp.float32)
    h = jnp.maximum(h + b1_ref[...], 0.0)              # f32 epilogue (v5e-safe)
    y = jnp.dot(h.astype(jnp.bfloat16), w2_ref[...],
                preferred_element_type=jnp.float32)
    y_ref[...] = y + b2_ref[...]


# ---------------------------------------------------------------------------
# One-time parameter layout prep (hoisted out of the per-forward path).
# ---------------------------------------------------------------------------
def prepare_params(w1, b1, w2, b2):
    """bf16 MXU weights + lane-dense (D_out padded to 128) layer-2 weight/bias.

    This HBM pass is paid once at model init, not on every forward call.
    """
    D_in, H1 = w1.shape
    D_out = w2.shape[1]
    n_pad = _round_up(D_out, 128)
    w1_bf = w1.astype(jnp.bfloat16)
    b1_2d = b1.reshape(1, H1).astype(jnp.float32)
    w2_bf = jnp.zeros((H1, n_pad), jnp.bfloat16).at[:, :D_out].set(
        w2.astype(jnp.bfloat16))
    b2_p = jnp.zeros((1, n_pad), jnp.float32).at[:, :D_out].set(
        b2.reshape(1, D_out).astype(jnp.float32))
    return w1_bf, b1_2d, w2_bf, b2_p


# ---------------------------------------------------------------------------
# Forward wrapper.
# ---------------------------------------------------------------------------
@functools.partial(
    jax.jit, static_argnames=("d_out", "block_b", "single_buffer_weights"))
def two_layer_net(x, w1_bf, b1_2d, w2_bf, b2_p, *, d_out,
                  block_b=1024, single_buffer_weights=True):
    """Forward pass. x: [B, D_in] f32 -> [B, d_out] f32 (f32 accumulation)."""
    B, D_in = x.shape
    H1 = w1_bf.shape[1]
    N_pad = w2_bf.shape[1]

    # ---- batch tiling ------------------------------------------------------
    # Big tiles amortize the ~0.35 us/step pipeline overhead (small tiles sit
    # <30% of HBM roofline; 512+ rows reach ~85%).  Rows rounded to 16.
    TB = _round_up(min(block_b, _round_up(B, 16)), 16)
    B_pad = _round_up(B, TB)
    # Keep >= 2 grid steps when the batch allows it so the "parallel" batch axis
    # can split across both TensorCores on v7x and DMA overlaps compute.
    if B_pad // TB < 2 and B_pad >= 32:
        TB = _round_up(max(B_pad // 2, 16), 16)
        B_pad = _round_up(B, TB)
    if B_pad != B:
        x = jnp.pad(x, ((0, B_pad - B), (0, 0)))
    grid = (B_pad // TB,)

    # ---- VMEM budget -------------------------------------------------------
    # x/out tiles are double-buffered by the pipeline; weights/biases have a
    # constant index_map and stay resident (single-buffered when honoured).
    weight_bytes = (D_in * H1 + H1 * N_pad) * 2 + (H1 + N_pad) * 4
    if not single_buffer_weights:
        weight_bytes *= 2
    vmem_est = (
        2 * TB * D_in * 4            # x tile (f32), double-buffered
        + 2 * TB * N_pad * 4         # out tile (f32), double-buffered
        + weight_bytes               # resident weights + biases
        + TB * D_in * 2              # bf16 copy of x tile
        + TB * H1 * (4 + 2)          # h (f32) + bf16 copy of h
        + TB * N_pad * 4             # y before bias add
    )
    vmem_needed = int(vmem_est * 1.25)   # ~25% headroom for compiler scratch
    # Generation-aware ceiling: ~75% of physical VMEM (64 MiB v7x, 128 MiB v5e/v6e).
    try:
        vmem_cap = int(pltpu.get_tpu_info().vmem_capacity_bytes)
    except Exception:  # query unavailable -> conservative (v7x-sized) assumption
        vmem_cap = 64 << 20
    vmem_limit = int(min(max(vmem_needed, 16 << 20), int(0.75 * vmem_cap)))

    # TODO(synk): contraction-tiled fallback (grid axis over H1 with an f32 VMEM
    # accumulator, init/finalize via pl.when) for weights too large to stay
    # VMEM-resident on v7x's 64 MiB.

    cost = pl.CostEstimate(
        flops=2 * B * (D_in * H1 + H1 * d_out),
        transcendentals=0,
        bytes_accessed=(x.size * 4 + w1_bf.size * 2 + w2_bf.size * 2
                        + b1_2d.size * 4 + b2_p.size * 4 + B_pad * N_pad * 4),
    )

    # Constant index_map -> blocks never change across the grid; double-buffering
    # them is pure VMEM waste, so request a single buffer.
    def resident_spec(shape):
        if single_buffer_weights:
            return pl.BlockSpec(shape, lambda i: (0, 0),
                                pipeline_mode=pl.Buffered(1))
        return pl.BlockSpec(shape, lambda i: (0, 0))

    y_pad = pl.pallas_call(
        two_layer_kernel,
        out_shape=jax.ShapeDtypeStruct((B_pad, N_pad), jnp.float32),
        grid=grid,
        in_specs=[
            pl.BlockSpec((TB, D_in), lambda i: (i, 0)),   # x: tiled over batch
            resident_spec((D_in, H1)),                    # w1: VMEM-resident
            resident_spec((1, H1)),                       # b1: VMEM-resident
            resident_spec((H1, N_pad)),                   # w2: VMEM-resident
            resident_spec((1, N_pad)),                    # b2: VMEM-resident
        ],
        # TODO(synk): for D_out << 128 at very large B, store the output with
        # batch on the lane axis (transposed) instead of zero-padding D_out to
        # 128, to avoid the N_pad/D_out writeback amplification.
        out_specs=pl.BlockSpec((TB, N_pad), lambda i: (i, 0)),
        compiler_params=pltpu.CompilerParams(
            dimension_semantics=("parallel",),   # megacore split over batch
            vmem_limit_bytes=vmem_limit,
        ),
        cost_estimate=cost,
    )(x, w1_bf, b1_2d, w2_bf, b2_p)

    # Padded batch rows / padded output columns carry garbage -- slice them off
    # before any reduction over the result.
    return y_pad[:B, :d_out]


# ---------------------------------------------------------------------------
# References.
# ---------------------------------------------------------------------------
def reference_bf16(x, w1, b1, w2, b2):
    # Intentionally matches the kernel's numerics: bf16 MXU operands, f32 acc.
    h = jnp.dot(x.astype(jnp.bfloat16), w1.astype(jnp.bfloat16),
                preferred_element_type=jnp.float32) + b1.reshape(1, -1)
    h = jnp.maximum(h, 0.0)
    return jnp.dot(h.astype(jnp.bfloat16), w2.astype(jnp.bfloat16),
                   preferred_element_type=jnp.float32) + b2.reshape(1, -1)


def reference_f32(x, w1, b1, w2, b2):
    # True f32 PyTorch-semantics forward; compared with a looser tolerance since
    # the kernel deliberately uses bf16 MXU operands.
    h = jnp.maximum(x @ w1 + b1.reshape(1, -1), 0.0)
    return h @ w2 + b2.reshape(1, -1)


if __name__ == "__main__":
    # The original training script feeds scalar features; the module is generic
    # in (D_in, H1, D_out).  Keep features/hidden small but give B a couple of
    # tiles so the batch pipeline / megacore split is actually exercised.
    B, D_in, H1, D_out = 256, 4, 32, 1

    key = jax.random.PRNGKey(0)
    kx, k1, kb1, k2, kb2 = jax.random.split(key, 5)

    x = jax.random.normal(kx, (B, D_in), dtype=jnp.float32)
    # Init mimicking torch.nn.Linear's uniform(-1/sqrt(fan_in), 1/sqrt(fan_in)).
    lim1 = 1.0 / (D_in ** 0.5)
    lim2 = 1.0 / (H1 ** 0.5)
    w1 = jax.random.uniform(k1, (D_in, H1), jnp.float32, -lim1, lim1)
    b1 = jax.random.uniform(kb1, (H1,), jnp.float32, -lim1, lim1)
    w2 = jax.random.uniform(k2, (H1, D_out), jnp.float32, -lim2, lim2)
    b2 = jax.random.uniform(kb2, (D_out,), jnp.float32, -lim2, lim2)

    # One-time weight layout prep (hoisted out of the per-forward path).
    params = prepare_params(w1, b1, w2, b2)
    params = jax.block_until_ready(params)

    try:
        y = two_layer_net(x, *params, d_out=D_out, block_b=1024,
                          single_buffer_weights=True)
        jax.block_until_ready(y)
    except Exception:
        # Some jax versions may not honour pipeline_mode=pl.Buffered(1);
        # correctness first -- fall back to default (double-buffered) weights.
        y = two_layer_net(x, *params, d_out=D_out, block_b=1024,
                          single_buffer_weights=False)
        jax.block_until_ready(y)

    assert y.shape == (B, D_out), y.shape

    y_bf = reference_bf16(x, w1, b1, w2, b2)
    assert jnp.allclose(y, y_bf, atol=1e-3, rtol=1e-3), (
        float(jnp.max(jnp.abs(y - y_bf))))

    y_f32 = reference_f32(x, w1, b1, w2, b2)
    assert jnp.allclose(y, y_f32, atol=1e-1, rtol=1e-1), (
        float(jnp.max(jnp.abs(y - y_f32))))

    print("KERNEL_OK")
</pallas_src>

<mosaic_0001>
module attributes {stable_mosaic.version = 11 : i64} {
  func.func @two_layer_kernel(%arg0: i32, %arg1: memref<128x4xf32, #tpu.memory_space<vmem>>, %arg2: memref<4x32xbf16, #tpu.memory_space<vmem>>, %arg3: memref<1x32xf32, #tpu.memory_space<vmem>>, %arg4: memref<32x128xbf16, #tpu.memory_space<vmem>>, %arg5: memref<1x128xf32, #tpu.memory_space<vmem>>, %arg6: memref<128x128xf32, #tpu.memory_space<vmem>>) attributes {dimension_semantics = [#tpu.dimension_semantics<parallel>], iteration_bounds = array<i64: 2>, scalar_prefetch = 0 : i64, scratch_operands = 0 : i64, tpu.core_type = #tpu.core_type<tc>, window_params = [{transform_indices = @transform_0, window_bounds = array<i64: 128, 4>}, {pipeline_mode = #tpu.pipeline_mode<synchronous>, transform_indices = @transform_1, window_bounds = array<i64: 4, 32>}, {pipeline_mode = #tpu.pipeline_mode<synchronous>, transform_indices = @transform_2, window_bounds = array<i64: 1, 32>}, {pipeline_mode = #tpu.pipeline_mode<synchronous>, transform_indices = @transform_3, window_bounds = array<i64: 32, 128>}, {pipeline_mode = #tpu.pipeline_mode<synchronous>, transform_indices = @transform_4, window_bounds = array<i64: 1, 128>}, {transform_indices = @transform_5, window_bounds = array<i64: 128, 128>}]} {
    %c0 = arith.constant 0 : index
    %c0_0 = arith.constant 0 : index
    %0 = vector.load %arg1[%c0, %c0_0] : memref<128x4xf32, #tpu.memory_space<vmem>>, vector<128x4xf32>
    %1 = arith.truncf %0 : vector<128x4xf32> to vector<128x4xbf16>
    %c0_1 = arith.constant 0 : index
    %c0_2 = arith.constant 0 : index
    %2 = vector.load %arg2[%c0_1, %c0_2] : memref<4x32xbf16, #tpu.memory_space<vmem>>, vector<4x32xbf16>
    %cst = arith.constant dense<0.000000e+00> : vector<128x32xf32>
    %3 = tpu.matmul %1, %2, %cst {dimension_numbers = #tpu.dot_dimension_numbers<[1], [0], [0], [1], [0, 0, 1, 1], [], []>} : vector<128x4xbf16>, vector<4x32xbf16>, vector<128x32xf32> -> vector<128x32xf32>
    %c0_3 = arith.constant 0 : index
    %c0_4 = arith.constant 0 : index
    %4 = vector.load %arg3[%c0_3, %c0_4] : memref<1x32xf32, #tpu.memory_space<vmem>>, vector<1x32xf32>
    %5 = vector.broadcast %4 : vector<1x32xf32> to vector<128x32xf32>
    %6 = arith.addf %3, %5 : vector<128x32xf32>
    %cst_5 = arith.constant 0.000000e+00 : f32
    %7 = vector.broadcast %cst_5 : f32 to vector<128x32xf32>
    %8 = arith.maximumf %6, %7 : vector<128x32xf32>
    %9 = arith.truncf %8 : vector<128x32xf32> to vector<128x32xbf16>
    %c0_6 = arith.constant 0 : index
    %c0_7 = arith.constant 0 : index
    %10 = vector.load %arg4[%c0_6, %c0_7] : memref<32x128xbf16, #tpu.memory_space<vmem>>, vector<32x128xbf16>
    %cst_8 = arith.constant dense<0.000000e+00> : vector<128x128xf32>
    %11 = tpu.matmul %9, %10, %cst_8 {dimension_numbers = #tpu.dot_dimension_numbers<[1], [0], [0], [1], [0, 0, 1, 1], [], []>} : vector<128x32xbf16>, vector<32x128xbf16>, vector<128x128xf32> -> vector<128x128xf32>
    %c0_9 = arith.constant 0 : index
    %c0_10 = arith.constant 0 : index
    %12 = vector.load %arg5[%c0_9, %c0_10] : memref<1x128xf32, #tpu.memory_space<vmem>>, vector<1x128xf32>
    %13 = vector.broadcast %12 : vector<1x128xf32> to vector<128x128xf32>
    %14 = arith.addf %11, %13 : vector<128x128xf32>
    %c0_11 = arith.constant 0 : index
    %c0_12 = arith.constant 0 : index
    %15 = vector.load %arg6[%c0_11, %c0_12] : memref<128x128xf32, #tpu.memory_space<vmem>>, vector<128x128xf32>
    tpu.vector_store %arg6[%c0_11, %c0_12], %14 {strides = array<i32>} : memref<128x128xf32, #tpu.memory_space<vmem>>, vector<128x128xf32>,
    return
  }
  func.func @transform_0(%arg0: i32) -> (i32, i32) {
    %c0_i32 = arith.constant 0 : i32
    %c0_i32_0 = arith.constant 0 : i32
    return %arg0, %c0_i32 : i32, i32
  }
  func.func @transform_1(%arg0: i32) -> (i32, i32) {
    %c0_i32 = arith.constant 0 : i32
    %c0_i32_0 = arith.constant 0 : i32
    %c0_i32_1 = arith.constant 0 : i32
    return %c0_i32, %c0_i32_0 : i32, i32
  }
  func.func @transform_2(%arg0: i32) -> (i32, i32) {
    %c0_i32 = arith.constant 0 : i32
    %c0_i32_0 = arith.constant 0 : i32
    %c0_i32_1 = arith.constant 0 : i32
    return %c0_i32, %c0_i32_0 : i32, i32
  }
  func.func @transform_3(%arg0: i32) -> (i32, i32) {
    %c0_i32 = arith.constant 0 : i32
    %c0_i32_0 = arith.constant 0 : i32
    %c0_i32_1 = arith.constant 0 : i32
    return %c0_i32, %c0_i32_0 : i32, i32
  }
  func.func @transform_4(%arg0: i32) -> (i32, i32) {
    %c0_i32 = arith.constant 0 : i32
    %c0_i32_0 = arith.constant 0 : i32
    %c0_i32_1 = arith.constant 0 : i32
    return %c0_i32, %c0_i32_0 : i32, i32
  }
  func.func @transform_5(%arg0: i32) -> (i32, i32) {
    %c0_i32 = arith.constant 0 : i32
    %c0_i32_0 = arith.constant 0 : i32
    return %arg0, %c0_i32 : i32, i32
  }
}

module attributes {stable_mosaic.version = 11 : i64} {
  func.func @two_layer_kernel(%arg0: i32, %arg1: memref<128x4xf32, #tpu.memory_space<vmem>>, %arg2: memref<4x32xbf16, #tpu.memory_space<vmem>>, %arg3: memref<1x32xf32, #tpu.memory_space<vmem>>, %arg4: memref<32x128xbf16, #tpu.memory_space<vmem>>, %arg5: memref<1x128xf32, #tpu.memory_space<vmem>>, %arg6: memref<128x128xf32, #tpu.memory_space<vmem>>) attributes {dimension_semantics = [#tpu.dimension_semantics<parallel>], iteration_bounds = array<i64: 2>, scalar_prefetch = 0 : i64, scratch_operands = 0 : i64, tpu.core_type = #tpu.core_type<tc>, window_params = [{transform_indices = @transform_0, window_bounds = array<i64: 128, 4>}, {pipeline_mode = #tpu.pipeline_mode<synchronous>, transform_indices = @transform_1, window_bounds = array<i64: 4, 32>}, {pipeline_mode = #tpu.pipeline_mode<synchronous>, transform_indices = @transform_2, window_bounds = array<i64: 1, 32>}, {pipeline_mode = #tpu.pipeline_mode<synchronous>, transform_indices = @transform_3, window_bounds = array<i64: 32, 128>}, {pipeline_mode = #tpu.pipeline_mode<synchronous>, transform_indices = @transform_4, window_bounds = array<i64: 1, 128>}, {transform_indices = @transform_5, window_bounds = array<i64: 128, 128>}]} {
    %c0 = arith.constant 0 : index
    %c0_0 = arith.constant 0 : index
    %0 = vector.load %arg1[%c0, %c0_0] : memref<128x4xf32, #tpu.memory_space<vmem>>, vector<128x4xf32>
    %1 = arith.truncf %0 : vector<128x4xf32> to vector<128x4xbf16>
    %c0_1 = arith.constant 0 : index
    %c0_2 = arith.constant 0 : index
    %2 = vector.load %arg2[%c0_1, %c0_2] : memref<4x32xbf16, #tpu.memory_space<vmem>>, vector<4x32xbf16>
    %cst = arith.constant dense<0.000000e+00> : vector<128x32xf32>
    %3 = tpu.matmul %1, %2, %cst {dimension_numbers = #tpu.dot_dimension_numbers<[1], [0], [0], [1], [0, 0, 1, 1], [], []>} : vector<128x4xbf16>, vector<4x32xbf16>, vector<128x32xf32> -> vector<128x32xf32>
    %c0_3 = arith.constant 0 : index
    %c0_4 = arith.constant 0 : index
    %4 = vector.load %arg3[%c0_3, %c0_4] : memref<1x32xf32, #tpu.memory_space<vmem>>, vector<1x32xf32>
    %5 = vector.broadcast %4 : vector<1x32xf32> to vector<128x32xf32>
    %6 = arith.addf %3, %5 : vector<128x32xf32>
    %cst_5 = arith.constant 0.000000e+00 : f32
    %7 = vector.broadcast %cst_5 : f32 to vector<128x32xf32>
    %8 = arith.maximumf %6, %7 : vector<128x32xf32>
    %9 = arith.truncf %8 : vector<128x32xf32> to vector<128x32xbf16>
    %c0_6 = arith.constant 0 : index
    %c0_7 = arith.constant 0 : index
    %10 = vector.load %arg4[%c0_6, %c0_7] : memref<32x128xbf16, #tpu.memory_space<vmem>>, vector<32x128xbf16>
    %cst_8 = arith.constant dense<0.000000e+00> : vector<128x128xf32>
    %11 = tpu.matmul %9, %10, %cst_8 {dimension_numbers = #tpu.dot_dimension_numbers<[1], [0], [0], [1], [0, 0, 1, 1], [], []>} : vector<128x32xbf16>, vector<32x128xbf16>, vector<128x128xf32> -> vector<128x128xf32>
    %c0_9 = arith.constant 0 : index
    %c0_10 = arith.constant 0 : index
    %12 = vector.load %arg5[%c0_9, %c0_10] : memref<1x128xf32, #tpu.memory_space<vmem>>, vector<1x128xf32>
    %13 = vector.broadcast %12 : vector<1x128xf32> to vector<128x128xf32>
    %14 = arith.addf %11, %13 : vector<128x128xf32>
    %c0_11 = arith.constant 0 : index
    %c0_12 = arith.constant 0 : index
    %15 = vector.load %arg6[%c0_11, %c0_12] : memref<128x128xf32, #tpu.memory_space<vmem>>, vector<128x128xf32>
    tpu.vector_store %arg6[%c0_11, %c0_12], %14 {strides = array<i32>} : memref<128x128xf32, #tpu.memory_space<vmem>>, vector<128x128xf32>,
    return
  }
  func.func @transform_0(%arg0: i32) -> (i32, i32) {
    %c0_i32 = arith.constant 0 : i32
    %c0_i32_0 = arith.constant 0 : i32
    return %arg0, %c0_i32 : i32, i32
  }
  func.func @transform_1(%arg0: i32) -> (i32, i32) {
    %c0_i32 = arith.constant 0 : i32
    %c0_i32_0 = arith.constant 0 : i32
    %c0_i32_1 = arith.constant 0 : i32
    return %c0_i32, %c0_i32_0 : i32, i32
  }
  func.func @transform_2(%arg0: i32) -> (i32, i32) {
    %c0_i32 = arith.constant 0 : i32
    %c0_i32_0 = arith.constant 0 : i32
    %c0_i32_1 = arith.constant 0 : i32
    return %c0_i32, %c0_i32_0 : i32, i32
  }
  func.func @transform_3(%arg0: i32) -> (i32, i32) {
    %c0_i32 = arith.constant 0 : i32
    %c0_i32_0 = arith.constant 0 : i32
    %c0_i32_1 = arith.constant 0 : i32
    return %c0_i32, %c0_i32_0 : i32, i32
  }
  func.func @transform_4(%arg0: i32) -> (i32, i32) {
    %c0_i32 = arith.constant 0 : i32
    %c0_i32_0 = arith.constant 0 : i32
    %c0_i32_1 = arith.constant 0 : i32
    return %c0_i32, %c0_i32_0 : i32, i32
  }
  func.func @transform_5(%arg0: i32) -> (i32, i32) {
    %c0_i32 = arith.constant 0 : i32
    %c0_i32_0 = arith.constant 0 : i32
    return %arg0, %c0_i32 : i32, i32
  }
}

</mosaic_0001>

<llo_original>
// kernel: two_layer_net.1
$region0: #{two_layer_net.1}
  #allocation0 [shape = 'u32[]', space=smem, size = 0x4, offset = 0x4, fixed_abs, tag = 'smem constant byte address 0x4 - core index']
  #allocation1 [shape = 'u32[72,128]{1,0:T(1,128)}', space=vmem, size = 0x9000, scoped, tag = 'internal scratch']
  %s0 = inlined_call_operand.vmem [shape: f32[256,4], index: 0, kind: input, shape index: {}]
  %s1 = inlined_call_operand.vmem [shape: bf16[4,32], index: 1, kind: input, shape index: {}]
  %s2 = inlined_call_operand.vmem [shape: f32[1,32], index: 2, kind: input, shape index: {}]
  %s3 = inlined_call_operand.vmem [shape: bf16[32,128], index: 3, kind: input, shape index: {}]
  %s4 = inlined_call_operand.vmem [shape: f32[1,128], index: 4, kind: input, shape index: {}]
  %s5 = inlined_call_operand.vmem [shape: f32[256,128], index: 5, kind: output, shape index: {}]
  %s6 = sld [smem:[#allocation0]]
  $region53: #{two_layer_net.1} parent=0
    _
  %s8 = ssub.s32 1, %s6
  %s9 = scalar_select 0, %s8, %s6
  loop: start=0, step=1, limit=4
  $region2: #{two_layer_net.1} parent=0 // loop_pre_header
    _
  $region3: #{two_layer_net.1} parent=0 // loop_header
    %s11 = sphi 0, %s15
    %p12 = scmp.ge.s32.totalorder %s11, 4
    %s21 = sphi 0, %s23
    %s24 = sphi 0, %s21
    %s25 = sphi 0, %s24
    %s41 = sphi 0, %s25
    %s45 = sphi 0, %s45
    %s47 = sphi 0, %s45
    %s48 = sphi 0, %s47
    %s62 = sphi 0, %s48
    %s66 = sphi 0, %s66
    %s68 = sphi 0, %s66
    %s69 = sphi 0, %s68
    %s83 = sphi 0, %s69
    %s87 = sphi 0, %s87
    %s89 = sphi 0, %s87
    %s90 = sphi 0, %s89
    %s104 = sphi 0, %s90
    %s108 = sphi 0, %s108
    %s110 = sphi 0, %s108
    %s111 = sphi 0, %s110
    %s125 = sphi 0, %s111
    %s131 = sphi 0, %s133
    %s134 = sphi 0, %s131
    %s135 = sphi 0, %s134
    %s151 = sphi 0, %s135
  $region4: #{two_layer_net.1} parent=0 // loop_header_branch
    %14 = sbr.rel (%p12) target = $region8
  $region5: #{two_layer_net.1} parent=0 // loop_body
    %s16 = ssub.s32 %s11, 1
    %s17 = ssub.s32 %s11, 2
    %s18 = sadd.s32 %s11, 1
    %s19 = ssub.s32 %s11, %s18
    %p20 = scmp.eq.s32.totalorder %s19, 0
    %s22 = sadd.s32 %s21, 1
    %s23 = scalar_select %p20, %s21, %s22
    %p26 = pneg %p20
    %p27 = scmp.eq.s32.totalorder %s11, 1
    %p28 = por %p26, %p27
    %p29 = scmp.ne.s32.totalorder %s21, %s24
    %p30 = scmp.eq.s32.totalorder %s11, 0
    %p31 = por %p29, %p30
    %p32 = scmp.ne.s32.totalorder %s21, %s24
    %p33 = scmp.eq.s32.totalorder %s16, 1
    %p34 = por %p32, %p33
    %p35 = scmp.ne.s32.totalorder %s24, %s25
    %p36 = scmp.eq.s32.totalorder %s16, 0
    %p37 = por %p35, %p36
    %p38 = scmp.ne.s32.totalorder %s24, %s25
    %p39 = scmp.eq.s32.totalorder %s17, 1
    %p40 = por %p38, %p39
    %p42 = scmp.ne.s32.totalorder %s25, %s41
    %p43 = scmp.eq.s32.totalorder %s17, 0
    %p44 = por %p42, %p43
    %s46 = sadd.s32 %s45, 1
    %p49 = scmp.eq.s32.totalorder %s11, 1
    %p50 = scmp.ne.s32.totalorder %s45, %s47
    %p51 = scmp.eq.s32.totalorder %s11, 0
    %p52 = por %p50, %p51
    %p53 = scmp.ne.s32.totalorder %s45, %s47
    %p54 = scmp.eq.s32.totalorder %s16, 1
    %p55 = por %p53, %p54
    %p56 = scmp.ne.s32.totalorder %s47, %s48
    %p57 = scmp.eq.s32.totalorder %s16, 0
    %p58 = por %p56, %p57
    %p59 = scmp.ne.s32.totalorder %s47, %s48
    %p60 = scmp.eq.s32.totalorder %s17, 1
    %p61 = por %p59, %p60
    %p63 = scmp.ne.s32.totalorder %s48, %s62
    %p64 = scmp.eq.s32.totalorder %s17, 0
    %p65 = por %p63, %p64
    %s67 = sadd.s32 %s66, 1
    %p70 = scmp.eq.s32.totalorder %s11, 1
    %p71 = scmp.ne.s32.totalorder %s66, %s68
    %p72 = scmp.eq.s32.totalorder %s11, 0
    %p73 = por %p71, %p72
    %p74 = scmp.ne.s32.totalorder %s66, %s68
    %p75 = scmp.eq.s32.totalorder %s16, 1
    %p76 = por %p74, %p75
    %p77 = scmp.ne.s32.totalorder %s68, %s69
    %p78 = scmp.eq.s32.totalorder %s16, 0
    %p79 = por %p77, %p78
    %p80 = scmp.ne.s32.totalorder %s68, %s69
    %p81 = scmp.eq.s32.totalorder %s17, 1
    %p82 = por %p80, %p81
    %p84 = scmp.ne.s32.totalorder %s69, %s83
    %p85 = scmp.eq.s32.totalorder %s17, 0
    %p86 = por %p84, %p85
    %s88 = sadd.s32 %s87, 1
    %p91 = scmp.eq.s32.totalorder %s11, 1
    %p92 = scmp.ne.s32.totalorder %s87, %s89
    %p93 = scmp.eq.s32.totalorder %s11, 0
    %p94 = por %p92, %p93
    %p95 = scmp.ne.s32.totalorder %s87, %s89
    %p96 = scmp.eq.s32.totalorder %s16, 1
    %p97 = por %p95, %p96
    %p98 = scmp.ne.s32.totalorder %s89, %s90
    %p99 = scmp.eq.s32.totalorder %s16, 0
    %p100 = por %p98, %p99
    %p101 = scmp.ne.s32.totalorder %s89, %s90
    %p102 = scmp.eq.s32.totalorder %s17, 1
    %p103 = por %p101, %p102
    %p105 = scmp.ne.s32.totalorder %s90, %s104
    %p106 = scmp.eq.s32.totalorder %s17, 0
    %p107 = por %p105, %p106
    %s109 = sadd.s32 %s108, 1
    %p112 = scmp.eq.s32.totalorder %s11, 1
    %p113 = scmp.ne.s32.totalorder %s108, %s110
    %p114 = scmp.eq.s32.totalorder %s11, 0
    %p115 = por %p113, %p114
    %p116 = scmp.ne.s32.totalorder %s108, %s110
    %p117 = scmp.eq.s32.totalorder %s16, 1
    %p118 = por %p116, %p117
    %p119 = scmp.ne.s32.totalorder %s110, %s111
    %p120 = scmp.eq.s32.totalorder %s16, 0
    %p121 = por %p119, %p120
    %p122 = scmp.ne.s32.totalorder %s110, %s111
    %p123 = scmp.eq.s32.totalorder %s17, 1
    %p124 = por %p122, %p123
    %p126 = scmp.ne.s32.totalorder %s111, %s125
    %p127 = scmp.eq.s32.totalorder %s17, 0
    %p128 = por %p126, %p127
    %s129 = ssub.s32 %s11, %s18
    %p130 = scmp.eq.s32.totalorder %s129, 0
    %s132 = sadd.s32 %s131, 1
    %s133 = scalar_select %p130, %s131, %s132
    %p136 = pneg %p130
    %p137 = scmp.eq.s32.totalorder %s11, 1
    %p138 = por %p136, %p137
    %p139 = scmp.ne.s32.totalorder %s131, %s134
    %p140 = scmp.eq.s32.totalorder %s11, 0
    %p141 = por %p139, %p140
    %p142 = scmp.ne.s32.totalorder %s131, %s134
    %p143 = scmp.eq.s32.totalorder %s16, 1
    %p144 = por %p142, %p143
    %p145 = scmp.ne.s32.totalorder %s134, %s135
    %p146 = scmp.eq.s32.totalorder %s16, 0
    %p147 = por %p145, %p146
    %p148 = scmp.ne.s32.totalorder %s134, %s135
    %p149 = scmp.eq.s32.totalorder %s17, 1
    %p150 = por %p148, %p149
    %p152 = scmp.ne.s32.totalorder %s135, %s151
    %p153 = scmp.eq.s32.totalorder %s17, 0
    %p154 = por %p152, %p153
    %p155 = scmp.le.s32.totalorder 1, %s11
    %p156 = scmp.lt.s32.totalorder %s11, 3
    %p157 = pnand %p155, %p156
    %p158 = pneg %p157
    // Predicated region
    $region9: #{two_layer_net.1} parent=5 // pred_check
      _
    $region10: #{two_layer_net.1} parent=5 // pred_check_branch
      %160 = sbr.rel (%p157) target = $region12
    $region11: #{two_layer_net.1} parent=5 // pred_region
      %s161 = ssub.s32 %s11, 1
      // Predicated region
      $region13: #{two_layer_net.1} parent=11 // pred_check
        %p162 = pneg %p58
      $region14: #{two_layer_net.1} parent=11 // pred_check_branch
        %164 = sbr.rel (%p162) target = $region16
      $region15: #{two_layer_net.1} parent=11 // pred_region
        _
      $region16: #{two_layer_net.1} parent=11 // pred_fallthru
        _
      // Predicated region
      $region17: #{two_layer_net.1} parent=11 // pred_check
        %p165 = pneg %p79
      $region18: #{two_layer_net.1} parent=11 // pred_check_branch
        %167 = sbr.rel (%p165) target = $region20
      $region19: #{two_layer_net.1} parent=11 // pred_region
        _
      $region20: #{two_layer_net.1} parent=11 // pred_fallthru
        _
      // Predicated region
      $region21: #{two_layer_net.1} parent=11 // pred_check
        %p168 = pneg %p100
      $region22: #{two_layer_net.1} parent=11 // pred_check_branch
        %170 = sbr.rel (%p168) target = $region24
      $region23: #{two_layer_net.1} parent=11 // pred_region
        _
      $region24: #{two_layer_net.1} parent=11 // pred_fallthru
        _
      // Predicated region
      $region25: #{two_layer_net.1} parent=11 // pred_check
        %p171 = pneg %p121
      $region26: #{two_layer_net.1} parent=11 // pred_check_branch
        %173 = sbr.rel (%p171) target = $region28
      $region27: #{two_layer_net.1} parent=11 // pred_region
        _
      $region28: #{two_layer_net.1} parent=11 // pred_fallthru
        _
    $region12: #{two_layer_net.1} parent=5 // pred_fallthru
      _
    %p174 = scmp.lt.s32.totalorder %s11, 2
    // Predicated region
    $region29: #{two_layer_net.1} parent=5 // pred_check
      %p175 = pneg %p174
    $region30: #{two_layer_net.1} parent=5 // pred_check_branch
      %177 = sbr.rel (%p175) target = $region32
    $region31: #{two_layer_net.1} parent=5 // pred_region
      // Predicated region
      $region33: #{two_layer_net.1} parent=31 // pred_check
        %p178 = pneg %p31
      $region34: #{two_layer_net.1} parent=31 // pred_check_branch
        %180 = sbr.rel (%p178) target = $region36
      $region35: #{two_layer_net.1} parent=31 // pred_region
        %s181 = smul.u32 16, %s11
        %p182 = scmp.lt.s32.totalorder %s181, 31
        %s183 = scalar_select %p182, %s181, 31
        %s184 = smul.addr %s183, 8
        %s185 = scalar_lea.vmem %s0, %s184
        %s186 = smul.u32 16, %s11
      $region36: #{two_layer_net.1} parent=31 // pred_fallthru
        _
    $region32: #{two_layer_net.1} parent=5 // pred_fallthru
      _
    %p187 = scmp.le.s32.totalorder 1, %s11
    %p188 = scmp.lt.s32.totalorder %s11, 3
    %p189 = pnand %p187, %p188
    %p190 = pneg %p189
    // Predicated region
    $region37: #{two_layer_net.1} parent=5 // pred_check
      _
    $region38: #{two_layer_net.1} parent=5 // pred_check_branch
      %192 = sbr.rel (%p189) target = $region40
    $region39: #{two_layer_net.1} parent=5 // pred_region
      %s193 = ssub.s32 %s11, 1
      %s194 = smul.u32 16, %s16
      %p195 = scmp.lt.s32.totalorder %s194, 31
      %s196 = scalar_select %p195, %s194, 31
      %s197 = smul.addr %s196, 8
      %s198 = scalar_lea.vmem %s0, %s197
      %p199 = pneg %p37
      %p200 = pneg %p34
      %p201 = pneg %p58
      %p202 = pneg %p55
      %p203 = pneg %p79
      %p204 = pneg %p76
      %p205 = pneg %p100
      %p206 = pneg %p97
      %p207 = pneg %p121
      %p208 = pneg %p118
      %p209 = pneg %p147
      %p210 = pneg %p144
      %s211 = smul.u32 16, %s16
      %p212 = scmp.lt.s32.totalorder %s211, 31
      %s213 = scalar_select %p212, %s211, 31
      %s214 = smul.addr %s213, 8
      %s215 = scalar_lea.vmem %s5, %s214
      %s216 = smul.u32 16, %s16
      %p217 = scmp.lt.s32.totalorder %s216, 31
      %s218 = scalar_select %p217, %s216, 31
      %s219 = smul.addr %s218, 8
      %s220 = scalar_lea.vmem %s0, %s219
      %s221 = smul.u32 16, %s16
      %s222 = smul.u32 16, %s16
      %p223 = scmp.lt.s32.totalorder %s222, 31
      %s224 = scalar_select %p223, %s222, 31
      %s225 = smul.addr %s224, 8
      %s226 = scalar_lea.vmem %s5, %s225
      %s227 = smul.u32 16, %s16
      %v229 = vld [vmem:[%s220] sm:$0xff]
      %v230 = vld [vmem:[%s220 + $0x8] sm:$0xff]
      %v231 = vld [vmem:[%s220 + $0x10] sm:$0xff]
      %v232 = vld [vmem:[%s220 + $0x18] sm:$0xff]
      %v233 = vld [vmem:[%s220 + $0x20] sm:$0xff]
      %v234 = vld [vmem:[%s220 + $0x28] sm:$0xff]
      %v235 = vld [vmem:[%s220 + $0x30] sm:$0xff]
      %v236 = vld [vmem:[%s220 + $0x38] sm:$0xff]
      %v237 = vld [vmem:[%s220 + $0x40] sm:$0xff]
      %v238 = vld [vmem:[%s220 + $0x48] sm:$0xff]
      %v239 = vld [vmem:[%s220 + $0x50] sm:$0xff]
      %v240 = vld [vmem:[%s220 + $0x58] sm:$0xff]
      %v241 = vld [vmem:[%s220 + $0x60] sm:$0xff]
      %v242 = vld [vmem:[%s220 + $0x68] sm:$0xff]
      %v243 = vld [vmem:[%s220 + $0x70] sm:$0xff]
      %v244 = vld [vmem:[%s220 + $0x78] sm:$0xff]
      %v245 = vpack.c.bf16 %v230, %v229
      %v246 = vpack.c.bf16 %v232, %v231
      %v247 = vpack.c.bf16 %v234, %v233
      %v248 = vpack.c.bf16 %v236, %v235
      %v249 = vpack.c.bf16 %v238, %v237
      %v250 = vpack.c.bf16 %v240, %v239
      %v251 = vpack.c.bf16 %v242, %v241
      %v252 = vpack.c.bf16 %v244, %v243
      %v253 = vld [vmem:[%s1] sm:$0x3]
      %v254 = vld [vmem:[%s2] sm:$0x1]
      %v256 = vperm.slane %v254, 0
      %vm258 = vcmask 31744
      %v260 = vsel %vm258, %v245, 0
      %v263 = vsel %vm258, %v246, 0
      %v266 = vsel %vm258, %v247, 0
      %v269 = vsel %vm258, %v248, 0
      %v272 = vsel %vm258, %v249, 0
      %v275 = vsel %vm258, %v250, 0
      %v278 = vsel %vm258, %v251, 0
      %v281 = vsel %vm258, %v252, 0
      %vm283 = vcmask 1041408
      %v285 = vsel %vm283, %v253, 0
      %287 = vmatpush.bf16.msra.mxu0 0
      %288 = vmatpush.bf16.msra.mxu0 0
      %289 = vmatpush.bf16.msra.mxu0 0
      %290 = vmatpush.bf16.msra.mxu0 0
      %291 = vmatpush.bf16.msra.mxu0 0
      %292 = vmatpush.bf16.msra.mxu0 0
      %293 = vmatpush.bf16.msra.mxu0 0
      %294 = vmatpush.bf16.msra.mxu0 %v285
      %295 = vmatmul.bf16.gmra.mxu0 %v260
      %v296 = vpop.f32.mrf.mxu0
      %v297 = vadd.f32 %v256, %v296
      %v298 = vpop.f32.mrf.mxu0
      %v299 = vadd.f32 %v256, %v298
      %300 = vmatmul.bf16.gmra.mxu0 %v263
      %v301 = vpop.f32.mrf.mxu0
      %v302 = vadd.f32 %v256, %v301
      %v303 = vpop.f32.mrf.mxu0
      %v304 = vadd.f32 %v256, %v303
      %305 = vmatmul.bf16.gmra.mxu0 %v266
      %v306 = vpop.f32.mrf.mxu0
      %v307 = vadd.f32 %v256, %v306
      %v308 = vpop.f32.mrf.mxu0
      %v309 = vadd.f32 %v256, %v308
      %310 = vmatmul.bf16.gmra.mxu0 %v269
      %v311 = vpop.f32.mrf.mxu0
      %v312 = vadd.f32 %v256, %v311
      %v313 = vpop.f32.mrf.mxu0
      %v314 = vadd.f32 %v256, %v313
      %315 = vmatmul.bf16.gmra.mxu0 %v272
      %v316 = vpop.f32.mrf.mxu0
      %v317 = vadd.f32 %v256, %v316
      %v318 = vpop.f32.mrf.mxu0
      %v319 = vadd.f32 %v256, %v318
      %320 = vmatmul.bf16.gmra.mxu0 %v275
      %v321 = vpop.f32.mrf.mxu0
      %v322 = vadd.f32 %v256, %v321
      %v323 = vpop.f32.mrf.mxu0
      %v324 = vadd.f32 %v256, %v323
      %325 = vmatmul.bf16.gmra.mxu0 %v278
      %v326 = vpop.f32.mrf.mxu0
      %v327 = vadd.f32 %v256, %v326
      %v328 = vpop.f32.mrf.mxu0
      %v329 = vadd.f32 %v256, %v328
      %330 = vmatmul.bf16.gmra.mxu0 %v281
      %v331 = vpop.f32.mrf.mxu0
      %v332 = vadd.f32 %v256, %v331
      %v333 = vpop.f32.mrf.mxu0
      %v334 = vadd.f32 %v256, %v333
      %335 = vdwg.mxu0
      %v336 = vmax.f32 %v297, 0.0
      %v337 = vmax.f32 %v299, 0.0
      %v338 = vmax.f32 %v302, 0.0
      %v339 = vmax.f32 %v304, 0.0
      %v340 = vmax.f32 %v307, 0.0
      %v341 = vmax.f32 %v309, 0.0
      %v342 = vmax.f32 %v312, 0.0
      %v343 = vmax.f32 %v314, 0.0
      %v344 = vmax.f32 %v317, 0.0
      %v345 = vmax.f32 %v319, 0.0
      %v346 = vmax.f32 %v322, 0.0
      %v347 = vmax.f32 %v324, 0.0
      %v348 = vmax.f32 %v327, 0.0
      %v349 = vmax.f32 %v329, 0.0
      %v350 = vmax.f32 %v332, 0.0
      %v351 = vmax.f32 %v334, 0.0
      %v352 = vpack.c.bf16 %v337, %v336
      %v353 = vpack.c.bf16 %v339, %v338
      %v354 = vpack.c.bf16 %v341, %v340
      %v355 = vpack.c.bf16 %v343, %v342
      %v356 = vpack.c.bf16 %v345, %v344
      %v357 = vpack.c.bf16 %v347, %v346
      %v358 = vpack.c.bf16 %v349, %v348
      %v359 = vpack.c.bf16 %v351, %v350
      %v360 = vld [vmem:[%s3] sm:$0xf]
      %v361 = vld [vmem:[%s3 + $0x4] sm:$0xf]
      %v362 = vld [vmem:[%s3 + $0x8] sm:$0xf]
      %v363 = vld [vmem:[%s3 + $0xc] sm:$0xf]
      %v364 = vld [vmem:[%s4] sm:$0x1]
      %v366 = vperm.slane %v364, 0
      %v372 = vunpack.c.l.b16 %v360
      %v373 = vunpack.c.l.b16 %v361
      %v374 = vunpack.c.l.b16 %v362
      %v375 = vunpack.c.l.b16 %v363
      %v376 = vpack.c.b16 %v373, %v372
      %v377 = vpack.c.b16 %v375, %v374
      %vm380 = vcmask 261120
      %v382 = vsel %vm380, %v352, 0
      %v385 = vsel %vm380, %v353, 0
      %v388 = vsel %vm380, %v354, 0
      %v391 = vsel %vm380, %v355, 0
      %v394 = vsel %vm380, %v356, 0
      %v397 = vsel %vm380, %v357, 0
      %v400 = vsel %vm380, %v358, 0
      %v403 = vsel %vm380, %v359, 0
      %405 = vmatpush.bf16.msra.mxu0 0
      %406 = vmatpush.bf16.msra.mxu0 0
      %407 = vmatpush.bf16.msra.mxu0 0
      %408 = vmatpush.bf16.msra.mxu0 0
      %409 = vmatpush.bf16.msra.mxu0 0
      %410 = vmatpush.bf16.msra.mxu0 0
      %411 = vmatpush.bf16.msra.mxu0 %v377
      %412 = vmatpush.bf16.msra.mxu0 %v376
      %413 = vmatmul.bf16.gmra.mxu0 %v382
      %v414 = vpop.f32.mrf.mxu0
      %v415 = vadd.f32 %v366, %v414
      %v416 = vpop.f32.mrf.mxu0
      %v417 = vadd.f32 %v366, %v416
      %418 = vmatmul.bf16.gmra.mxu0 %v385
      %v419 = vpop.f32.mrf.mxu0
      %v420 = vadd.f32 %v366, %v419
      %v421 = vpop.f32.mrf.mxu0
      %v422 = vadd.f32 %v366, %v421
      %423 = vmatmul.bf16.gmra.mxu0 %v388
      %v424 = vpop.f32.mrf.mxu0
      %v425 = vadd.f32 %v366, %v424
      %v426 = vpop.f32.mrf.mxu0
      %v427 = vadd.f32 %v366, %v426
      %428 = vmatmul.bf16.gmra.mxu0 %v391
      %v429 = vpop.f32.mrf.mxu0
      %v430 = vadd.f32 %v366, %v429
      %v431 = vpop.f32.mrf.mxu0
      %v432 = vadd.f32 %v366, %v431
      %433 = vmatmul.bf16.gmra.mxu0 %v394
      %v434 = vpop.f32.mrf.mxu0
      %v435 = vadd.f32 %v366, %v434
      %v436 = vpop.f32.mrf.mxu0
      %v437 = vadd.f32 %v366, %v436
      %438 = vmatmul.bf16.gmra.mxu0 %v397
      %v439 = vpop.f32.mrf.mxu0
      %v440 = vadd.f32 %v366, %v439
      %v441 = vpop.f32.mrf.mxu0
      %v442 = vadd.f32 %v366, %v441
      %443 = vmatmul.bf16.gmra.mxu0 %v400
      %v444 = vpop.f32.mrf.mxu0
      %v445 = vadd.f32 %v366, %v444
      %v446 = vpop.f32.mrf.mxu0
      %v447 = vadd.f32 %v366, %v446
      %448 = vmatmul.bf16.gmra.mxu0 %v403
      %v449 = vpop.f32.mrf.mxu0
      %v450 = vadd.f32 %v366, %v449
      %v451 = vpop.f32.mrf.mxu0
      %v452 = vadd.f32 %v366, %v451
      %453 = vdwg.mxu0
      %454 = vst [vmem:[%s226] sm:$0xff] %v415
      %455 = vst [vmem:[%s226 + $0x8] sm:$0xff] %v417
      %456 = vst [vmem:[%s226 + $0x10] sm:$0xff] %v420
      %457 = vst [vmem:[%s226 + $0x18] sm:$0xff] %v422
      %458 = vst [vmem:[%s226 + $0x20] sm:$0xff] %v425
      %459 = vst [vmem:[%s226 + $0x28] sm:$0xff] %v427
      %460 = vst [vmem:[%s226 + $0x30] sm:$0xff] %v430
      %461 = vst [vmem:[%s226 + $0x38] sm:$0xff] %v432
      %462 = vst [vmem:[%s226 + $0x40] sm:$0xff] %v435
      %463 = vst [vmem:[%s226 + $0x48] sm:$0xff] %v437
      %464 = vst [vmem:[%s226 + $0x50] sm:$0xff] %v440
      %465 = vst [vmem:[%s226 + $0x58] sm:$0xff] %v442
      %466 = vst [vmem:[%s226 + $0x60] sm:$0xff] %v445
      %467 = vst [vmem:[%s226 + $0x68] sm:$0xff] %v447
      %468 = vst [vmem:[%s226 + $0x70] sm:$0xff] %v450
      %469 = vst [vmem:[%s226 + $0x78] sm:$0xff] %v452
      %s470 = smul.u32 16, %s16
      %p471 = scmp.lt.s32.totalorder %s470, 31
      %s472 = scalar_select %p471, %s470, 31
      %s473 = smul.addr %s472, 8
      %s474 = scalar_lea.vmem %s5, %s473
      // Predicated region
      $region41: #{two_layer_net.1} parent=39 // pred_check
        %p475 = pneg %p144
      $region42: #{two_layer_net.1} parent=39 // pred_check_branch
        %477 = sbr.rel (%p475) target = $region44
      $region43: #{two_layer_net.1} parent=39 // pred_region
        %s478 = smul.u32 16, %s16
      $region44: #{two_layer_net.1} parent=39 // pred_fallthru
        _
    $region40: #{two_layer_net.1} parent=5 // pred_fallthru
      _
    %p479 = scmp.le.s32.totalorder 2, %s11
    // Predicated region
    $region45: #{two_layer_net.1} parent=5 // pred_check
      %p480 = pneg %p479
    $region46: #{two_layer_net.1} parent=5 // pred_check_branch
      %482 = sbr.rel (%p480) target = $region48
    $region47: #{two_layer_net.1} parent=5 // pred_region
      %s483 = ssub.s32 %s11, 2
      // Predicated region
      $region49: #{two_layer_net.1} parent=47 // pred_check
        %p484 = pneg %p150
      $region50: #{two_layer_net.1} parent=47 // pred_check_branch
        %486 = sbr.rel (%p484) target = $region52
      $region51: #{two_layer_net.1} parent=47 // pred_region
        %s487 = smul.u32 16, %s17
        %p488 = scmp.lt.s32.totalorder %s487, 31
        %s489 = scalar_select %p488, %s487, 31
        %s490 = smul.addr %s489, 8
        %s491 = scalar_lea.vmem %s5, %s490
      $region52: #{two_layer_net.1} parent=47 // pred_fallthru
        _
    $region48: #{two_layer_net.1} parent=5 // pred_fallthru
      _
  $region6: #{two_layer_net.1} parent=0 // loop_footer
    %s15 = sadd.s32 1, %s11
  $region7: #{two_layer_net.1} parent=0 // loop_footer_branch
    %10 = sbr.rel target = $region3
  $region8: #{two_layer_net.1} parent=0 // loop_exit
    _

// kernel: two_layer_net.1
$region0: #{two_layer_net.1}
  #allocation0 [shape = 'u32[]', space=smem, size = 0x4, offset = 0x4, fixed_abs, tag = 'smem constant byte address 0x4 - core index']
  #allocation1 [shape = 'u32[72,128]{1,0:T(1,128)}', space=vmem, size = 0x9000, scoped, tag = 'internal scratch']
  %s0 = inlined_call_operand.vmem [shape: f32[256,4], index: 0, kind: input, shape index: {}]
  %s1 = inlined_call_operand.vmem [shape: bf16[4,32], index: 1, kind: input, shape index: {}]
  %s2 = inlined_call_operand.vmem [shape: f32[1,32], index: 2, kind: input, shape index: {}]
  %s3 = inlined_call_operand.vmem [shape: bf16[32,128], index: 3, kind: input, shape index: {}]
  %s4 = inlined_call_operand.vmem [shape: f32[1,128], index: 4, kind: input, shape index: {}]
  %s5 = inlined_call_operand.vmem [shape: f32[256,128], index: 5, kind: output, shape index: {}]
  %s6 = sld [smem:[#allocation0]]
  $region53: #{two_layer_net.1} parent=0
    _
  %s8 = ssub.s32 1, %s6
  %s9 = scalar_select 0, %s8, %s6
  loop: start=0, step=1, limit=4
  $region2: #{two_layer_net.1} parent=0 // loop_pre_header
    _
  $region3: #{two_layer_net.1} parent=0 // loop_header
    %s11 = sphi 0, %s15
    %p12 = scmp.ge.s32.totalorder %s11, 4
    %s21 = sphi 0, %s23
    %s24 = sphi 0, %s21
    %s25 = sphi 0, %s24
    %s41 = sphi 0, %s25
    %s45 = sphi 0, %s45
    %s47 = sphi 0, %s45
    %s48 = sphi 0, %s47
    %s62 = sphi 0, %s48
    %s66 = sphi 0, %s66
    %s68 = sphi 0, %s66
    %s69 = sphi 0, %s68
    %s83 = sphi 0, %s69
    %s87 = sphi 0, %s87
    %s89 = sphi 0, %s87
    %s90 = sphi 0, %s89
    %s104 = sphi 0, %s90
    %s108 = sphi 0, %s108
    %s110 = sphi 0, %s108
    %s111 = sphi 0, %s110
    %s125 = sphi 0, %s111
    %s131 = sphi 0, %s133
    %s134 = sphi 0, %s131
    %s135 = sphi 0, %s134
    %s151 = sphi 0, %s135
  $region4: #{two_layer_net.1} parent=0 // loop_header_branch
    %14 = sbr.rel (%p12) target = $region8
  $region5: #{two_layer_net.1} parent=0 // loop_body
    %s16 = ssub.s32 %s11, 1
    %s17 = ssub.s32 %s11, 2
    %s18 = sadd.s32 %s11, 1
    %s19 = ssub.s32 %s11, %s18
    %p20 = scmp.eq.s32.totalorder %s19, 0
    %s22 = sadd.s32 %s21, 1
    %s23 = scalar_select %p20, %s21, %s22
    %p26 = pneg %p20
    %p27 = scmp.eq.s32.totalorder %s11, 1
    %p28 = por %p26, %p27
    %p29 = scmp.ne.s32.totalorder %s21, %s24
    %p30 = scmp.eq.s32.totalorder %s11, 0
    %p31 = por %p29, %p30
    %p32 = scmp.ne.s32.totalorder %s21, %s24
    %p33 = scmp.eq.s32.totalorder %s16, 1
    %p34 = por %p32, %p33
    %p35 = scmp.ne.s32.totalorder %s24, %s25
    %p36 = scmp.eq.s32.totalorder %s16, 0
    %p37 = por %p35, %p36
    %p38 = scmp.ne.s32.totalorder %s24, %s25
    %p39 = scmp.eq.s32.totalorder %s17, 1
    %p40 = por %p38, %p39
    %p42 = scmp.ne.s32.totalorder %s25, %s41
    %p43 = scmp.eq.s32.totalorder %s17, 0
    %p44 = por %p42, %p43
    %s46 = sadd.s32 %s45, 1
    %p49 = scmp.eq.s32.totalorder %s11, 1
    %p50 = scmp.ne.s32.totalorder %s45, %s47
    %p51 = scmp.eq.s32.totalorder %s11, 0
    %p52 = por %p50, %p51
    %p53 = scmp.ne.s32.totalorder %s45, %s47
    %p54 = scmp.eq.s32.totalorder %s16, 1
    %p55 = por %p53, %p54
    %p56 = scmp.ne.s32.totalorder %s47, %s48
    %p57 = scmp.eq.s32.totalorder %s16, 0
    %p58 = por %p56, %p57
    %p59 = scmp.ne.s32.totalorder %s47, %s48
    %p60 = scmp.eq.s32.totalorder %s17, 1
    %p61 = por %p59, %p60
    %p63 = scmp.ne.s32.totalorder %s48, %s62
    %p64 = scmp.eq.s32.totalorder %s17, 0
    %p65 = por %p63, %p64
    %s67 = sadd.s32 %s66, 1
    %p70 = scmp.eq.s32.totalorder %s11, 1
    %p71 = scmp.ne.s32.totalorder %s66, %s68
    %p72 = scmp.eq.s32.totalorder %s11, 0
    %p73 = por %p71, %p72
    %p74 = scmp.ne.s32.totalorder %s66, %s68
    %p75 = scmp.eq.s32.totalorder %s16, 1
    %p76 = por %p74, %p75
    %p77 = scmp.ne.s32.totalorder %s68, %s69
    %p78 = scmp.eq.s32.totalorder %s16, 0
    %p79 = por %p77, %p78
    %p80 = scmp.ne.s32.totalorder %s68, %s69
    %p81 = scmp.eq.s32.totalorder %s17, 1
    %p82 = por %p80, %p81
    %p84 = scmp.ne.s32.totalorder %s69, %s83
    %p85 = scmp.eq.s32.totalorder %s17, 0
    %p86 = por %p84, %p85
    %s88 = sadd.s32 %s87, 1
    %p91 = scmp.eq.s32.totalorder %s11, 1
    %p92 = scmp.ne.s32.totalorder %s87, %s89
    %p93 = scmp.eq.s32.totalorder %s11, 0
    %p94 = por %p92, %p93
    %p95 = scmp.ne.s32.totalorder %s87, %s89
    %p96 = scmp.eq.s32.totalorder %s16, 1
    %p97 = por %p95, %p96
    %p98 = scmp.ne.s32.totalorder %s89, %s90
    %p99 = scmp.eq.s32.totalorder %s16, 0
    %p100 = por %p98, %p99
    %p101 = scmp.ne.s32.totalorder %s89, %s90
    %p102 = scmp.eq.s32.totalorder %s17, 1
    %p103 = por %p101, %p102
    %p105 = scmp.ne.s32.totalorder %s90, %s104
    %p106 = scmp.eq.s32.totalorder %s17, 0
    %p107 = por %p105, %p106
    %s109 = sadd.s32 %s108, 1
    %p112 = scmp.eq.s32.totalorder %s11, 1
    %p113 = scmp.ne.s32.totalorder %s108, %s110
    %p114 = scmp.eq.s32.totalorder %s11, 0
    %p115 = por %p113, %p114
    %p116 = scmp.ne.s32.totalorder %s108, %s110
    %p117 = scmp.eq.s32.totalorder %s16, 1
    %p118 = por %p116, %p117
    %p119 = scmp.ne.s32.totalorder %s110, %s111
    %p120 = scmp.eq.s32.totalorder %s16, 0
    %p121 = por %p119, %p120
    %p122 = scmp.ne.s32.totalorder %s110, %s111
    %p123 = scmp.eq.s32.totalorder %s17, 1
    %p124 = por %p122, %p123
    %p126 = scmp.ne.s32.totalorder %s111, %s125
    %p127 = scmp.eq.s32.totalorder %s17, 0
    %p128 = por %p126, %p127
    %s129 = ssub.s32 %s11, %s18
    %p130 = scmp.eq.s32.totalorder %s129, 0
    %s132 = sadd.s32 %s131, 1
    %s133 = scalar_select %p130, %s131, %s132
    %p136 = pneg %p130
    %p137 = scmp.eq.s32.totalorder %s11, 1
    %p138 = por %p136, %p137
    %p139 = scmp.ne.s32.totalorder %s131, %s134
    %p140 = scmp.eq.s32.totalorder %s11, 0
    %p141 = por %p139, %p140
    %p142 = scmp.ne.s32.totalorder %s131, %s134
    %p143 = scmp.eq.s32.totalorder %s16, 1
    %p144 = por %p142, %p143
    %p145 = scmp.ne.s32.totalorder %s134, %s135
    %p146 = scmp.eq.s32.totalorder %s16, 0
    %p147 = por %p145, %p146
    %p148 = scmp.ne.s32.totalorder %s134, %s135
    %p149 = scmp.eq.s32.totalorder %s17, 1
    %p150 = por %p148, %p149
    %p152 = scmp.ne.s32.totalorder %s135, %s151
    %p153 = scmp.eq.s32.totalorder %s17, 0
    %p154 = por %p152, %p153
    %p155 = scmp.le.s32.totalorder 1, %s11
    %p156 = scmp.lt.s32.totalorder %s11, 3
    %p157 = pnand %p155, %p156
    %p158 = pneg %p157
    // Predicated region
    $region9: #{two_layer_net.1} parent=5 // pred_check
      _
    $region10: #{two_layer_net.1} parent=5 // pred_check_branch
      %160 = sbr.rel (%p157) target = $region12
    $region11: #{two_layer_net.1} parent=5 // pred_region
      %s161 = ssub.s32 %s11, 1
      // Predicated region
      $region13: #{two_layer_net.1} parent=11 // pred_check
        %p162 = pneg %p58
      $region14: #{two_layer_net.1} parent=11 // pred_check_branch
        %164 = sbr.rel (%p162) target = $region16
      $region15: #{two_layer_net.1} parent=11 // pred_region
        _
      $region16: #{two_layer_net.1} parent=11 // pred_fallthru
        _
      // Predicated region
      $region17: #{two_layer_net.1} parent=11 // pred_check
        %p165 = pneg %p79
      $region18: #{two_layer_net.1} parent=11 // pred_check_branch
        %167 = sbr.rel (%p165) target = $region20
      $region19: #{two_layer_net.1} parent=11 // pred_region
        _
      $region20: #{two_layer_net.1} parent=11 // pred_fallthru
        _
      // Predicated region
      $region21: #{two_layer_net.1} parent=11 // pred_check
        %p168 = pneg %p100
      $region22: #{two_layer_net.1} parent=11 // pred_check_branch
        %170 = sbr.rel (%p168) target = $region24
      $region23: #{two_layer_net.1} parent=11 // pred_region
        _
      $region24: #{two_layer_net.1} parent=11 // pred_fallthru
        _
      // Predicated region
      $region25: #{two_layer_net.1} parent=11 // pred_check
        %p171 = pneg %p121
      $region26: #{two_layer_net.1} parent=11 // pred_check_branch
        %173 = sbr.rel (%p171) target = $region28
      $region27: #{two_layer_net.1} parent=11 // pred_region
        _
      $region28: #{two_layer_net.1} parent=11 // pred_fallthru
        _
    $region12: #{two_layer_net.1} parent=5 // pred_fallthru
      _
    %p174 = scmp.lt.s32.totalorder %s11, 2
    // Predicated region
    $region29: #{two_layer_net.1} parent=5 // pred_check
      %p175 = pneg %p174
    $region30: #{two_layer_net.1} parent=5 // pred_check_branch
      %177 = sbr.rel (%p175) target = $region32
    $region31: #{two_layer_net.1} parent=5 // pred_region
      // Predicated region
      $region33: #{two_layer_net.1} parent=31 // pred_check
        %p178 = pneg %p31
      $region34: #{two_layer_net.1} parent=31 // pred_check_branch
        %180 = sbr.rel (%p178) target = $region36
      $region35: #{two_layer_net.1} parent=31 // pred_region
        %s181 = smul.u32 16, %s11
        %p182 = scmp.lt.s32.totalorder %s181, 31
        %s183 = scalar_select %p182, %s181, 31
        %s184 = smul.addr %s183, 8
        %s185 = scalar_lea.vmem %s0, %s184
        %s186 = smul.u32 16, %s11
      $region36: #{two_layer_net.1} parent=31 // pred_fallthru
        _
    $region32: #{two_layer_net.1} parent=5 // pred_fallthru
      _
    %p187 = scmp.le.s32.totalorder 1, %s11
    %p188 = scmp.lt.s32.totalorder %s11, 3
    %p189 = pnand %p187, %p188
    %p190 = pneg %p189
    // Predicated region
    $region37: #{two_layer_net.1} parent=5 // pred_check
      _
    $region38: #{two_layer_net.1} parent=5 // pred_check_branch
      %192 = sbr.rel (%p189) target = $region40
    $region39: #{two_layer_net.1} parent=5 // pred_region
      %s193 = ssub.s32 %s11, 1
      %s194 = smul.u32 16, %s16
      %p195 = scmp.lt.s32.totalorder %s194, 31
      %s196 = scalar_select %p195, %s194, 31
      %s197 = smul.addr %s196, 8
      %s198 = scalar_lea.vmem %s0, %s197
      %p199 = pneg %p37
      %p200 = pneg %p34
      %p201 = pneg %p58
      %p202 = pneg %p55
      %p203 = pneg %p79
      %p204 = pneg %p76
      %p205 = pneg %p100
      %p206 = pneg %p97
      %p207 = pneg %p121
      %p208 = pneg %p118
      %p209 = pneg %p147
      %p210 = pneg %p144
      %s211 = smul.u32 16, %s16
      %p212 = scmp.lt.s32.totalorder %s211, 31
      %s213 = scalar_select %p212, %s211, 31
      %s214 = smul.addr %s213, 8
      %s215 = scalar_lea.vmem %s5, %s214
      %s216 = smul.u32 16, %s16
      %p217 = scmp.lt.s32.totalorder %s216, 31
      %s218 = scalar_select %p217, %s216, 31
      %s219 = smul.addr %s218, 8
      %s220 = scalar_lea.vmem %s0, %s219
      %s221 = smul.u32 16, %s16
      %s222 = smul.u32 16, %s16
      %p223 = scmp.lt.s32.totalorder %s222, 31
      %s224 = scalar_select %p223, %s222, 31
      %s225 = smul.addr %s224, 8
      %s226 = scalar_lea.vmem %s5, %s225
      %s227 = smul.u32 16, %s16
      %v229 = vld [vmem:[%s220] sm:$0xff]
      %v230 = vld [vmem:[%s220 + $0x8] sm:$0xff]
      %v231 = vld [vmem:[%s220 + $0x10] sm:$0xff]
      %v232 = vld [vmem:[%s220 + $0x18] sm:$0xff]
      %v233 = vld [vmem:[%s220 + $0x20] sm:$0xff]
      %v234 = vld [vmem:[%s220 + $0x28] sm:$0xff]
      %v235 = vld [vmem:[%s220 + $0x30] sm:$0xff]
      %v236 = vld [vmem:[%s220 + $0x38] sm:$0xff]
      %v237 = vld [vmem:[%s220 + $0x40] sm:$0xff]
      %v238 = vld [vmem:[%s220 + $0x48] sm:$0xff]
      %v239 = vld [vmem:[%s220 + $0x50] sm:$0xff]
      %v240 = vld [vmem:[%s220 + $0x58] sm:$0xff]
      %v241 = vld [vmem:[%s220 + $0x60] sm:$0xff]
      %v242 = vld [vmem:[%s220 + $0x68] sm:$0xff]
      %v243 = vld [vmem:[%s220 + $0x70] sm:$0xff]
      %v244 = vld [vmem:[%s220 + $0x78] sm:$0xff]
      %v245 = vpack.c.bf16 %v230, %v229
      %v246 = vpack.c.bf16 %v232, %v231
      %v247 = vpack.c.bf16 %v234, %v233
      %v248 = vpack.c.bf16 %v236, %v235
      %v249 = vpack.c.bf16 %v238, %v237
      %v250 = vpack.c.bf16 %v240, %v239
      %v251 = vpack.c.bf16 %v242, %v241
      %v252 = vpack.c.bf16 %v244, %v243
      %v253 = vld [vmem:[%s1] sm:$0x3]
      %v254 = vld [vmem:[%s2] sm:$0x1]
      %v256 = vperm.slane %v254, 0
      %vm258 = vcmask 31744
      %v260 = vsel %vm258, %v245, 0
      %v263 = vsel %vm258, %v246, 0
      %v266 = vsel %vm258, %v247, 0
      %v269 = vsel %vm258, %v248, 0
      %v272 = vsel %vm258, %v249, 0
      %v275 = vsel %vm258, %v250, 0
      %v278 = vsel %vm258, %v251, 0
      %v281 = vsel %vm258, %v252, 0
      %vm283 = vcmask 1041408
      %v285 = vsel %vm283, %v253, 0
      %287 = vmatpush.bf16.msra.mxu0 0
      %288 = vmatpush.bf16.msra.mxu0 0
      %289 = vmatpush.bf16.msra.mxu0 0
      %290 = vmatpush.bf16.msra.mxu0 0
      %291 = vmatpush.bf16.msra.mxu0 0
      %292 = vmatpush.bf16.msra.mxu0 0
      %293 = vmatpush.bf16.msra.mxu0 0
      %294 = vmatpush.bf16.msra.mxu0 %v285
      %295 = vmatmul.bf16.gmra.mxu0 %v260
      %v296 = vpop.f32.mrf.mxu0
      %v297 = vadd.f32 %v256, %v296
      %v298 = vpop.f32.mrf.mxu0
      %v299 = vadd.f32 %v256, %v298
      %300 = vmatmul.bf16.gmra.mxu0 %v263
      %v301 = vpop.f32.mrf.mxu0
      %v302 = vadd.f32 %v256, %v301
      %v303 = vpop.f32.mrf.mxu0
      %v304 = vadd.f32 %v256, %v303
      %305 = vmatmul.bf16.gmra.mxu0 %v266
      %v306 = vpop.f32.mrf.mxu0
      %v307 = vadd.f32 %v256, %v306
      %v308 = vpop.f32.mrf.mxu0
      %v309 = vadd.f32 %v256, %v308
      %310 = vmatmul.bf16.gmra.mxu0 %v269
      %v311 = vpop.f32.mrf.mxu0
      %v312 = vadd.f32 %v256, %v311
      %v313 = vpop.f32.mrf.mxu0
      %v314 = vadd.f32 %v256, %v313
      %315 = vmatmul.bf16.gmra.mxu0 %v272
      %v316 = vpop.f32.mrf.mxu0
      %v317 = vadd.f32 %v256, %v316
      %v318 = vpop.f32.mrf.mxu0
      %v319 = vadd.f32 %v256, %v318
      %320 = vmatmul.bf16.gmra.mxu0 %v275
      %v321 = vpop.f32.mrf.mxu0
      %v322 = vadd.f32 %v256, %v321
      %v323 = vpop.f32.mrf.mxu0
      %v324 = vadd.f32 %v256, %v323
      %325 = vmatmul.bf16.gmra.mxu0 %v278
      %v326 = vpop.f32.mrf.mxu0
      %v327 = vadd.f32 %v256, %v326
      %v328 = vpop.f32.mrf.mxu0
      %v329 = vadd.f32 %v256, %v328
      %330 = vmatmul.bf16.gmra.mxu0 %v281
      %v331 = vpop.f32.mrf.mxu0
      %v332 = vadd.f32 %v256, %v331
      %v333 = vpop.f32.mrf.mxu0
      %v334 = vadd.f32 %v256, %v333
      %335 = vdwg.mxu0
      %v336 = vmax.f32 %v297, 0.0
      %v337 = vmax.f32 %v299, 0.0
      %v338 = vmax.f32 %v302, 0.0
      %v339 = vmax.f32 %v304, 0.0
      %v340 = vmax.f32 %v307, 0.0
      %v341 = vmax.f32 %v309, 0.0
      %v342 = vmax.f32 %v312, 0.0
      %v343 = vmax.f32 %v314, 0.0
      %v344 = vmax.f32 %v317, 0.0
      %v345 = vmax.f32 %v319, 0.0
      %v346 = vmax.f32 %v322, 0.0
      %v347 = vmax.f32 %v324, 0.0
      %v348 = vmax.f32 %v327, 0.0
      %v349 = vmax.f32 %v329, 0.0
      %v350 = vmax.f32 %v332, 0.0
      %v351 = vmax.f32 %v334, 0.0
      %v352 = vpack.c.bf16 %v337, %v336
      %v353 = vpack.c.bf16 %v339, %v338
      %v354 = vpack.c.bf16 %v341, %v340
      %v355 = vpack.c.bf16 %v343, %v342
      %v356 = vpack.c.bf16 %v345, %v344
      %v357 = vpack.c.bf16 %v347, %v346
      %v358 = vpack.c.bf16 %v349, %v348
      %v359 = vpack.c.bf16 %v351, %v350
      %v360 = vld [vmem:[%s3] sm:$0xf]
      %v361 = vld [vmem:[%s3 + $0x4] sm:$0xf]
      %v362 = vld [vmem:[%s3 + $0x8] sm:$0xf]
      %v363 = vld [vmem:[%s3 + $0xc] sm:$0xf]
      %v364 = vld [vmem:[%s4] sm:$0x1]
      %v366 = vperm.slane %v364, 0
      %v372 = vunpack.c.l.b16 %v360
      %v373 = vunpack.c.l.b16 %v361
      %v374 = vunpack.c.l.b16 %v362
      %v375 = vunpack.c.l.b16 %v363
      %v376 = vpack.c.b16 %v373, %v372
      %v377 = vpack.c.b16 %v375, %v374
      %vm380 = vcmask 261120
      %v382 = vsel %vm380, %v352, 0
      %v385 = vsel %vm380, %v353, 0
      %v388 = vsel %vm380, %v354, 0
      %v391 = vsel %vm380, %v355, 0
      %v394 = vsel %vm380, %v356, 0
      %v397 = vsel %vm380, %v357, 0
      %v400 = vsel %vm380, %v358, 0
      %v403 = vsel %vm380, %v359, 0
      %405 = vmatpush.bf16.msra.mxu0 0
      %406 = vmatpush.bf16.msra.mxu0 0
      %407 = vmatpush.bf16.msra.mxu0 0
      %408 = vmatpush.bf16.msra.mxu0 0
      %409 = vmatpush.bf16.msra.mxu0 0
      %410 = vmatpush.bf16.msra.mxu0 0
      %411 = vmatpush.bf16.msra.mxu0 %v377
      %412 = vmatpush.bf16.msra.mxu0 %v376
      %413 = vmatmul.bf16.gmra.mxu0 %v382
      %v414 = vpop.f32.mrf.mxu0
      %v415 = vadd.f32 %v366, %v414
      %v416 = vpop.f32.mrf.mxu0
      %v417 = vadd.f32 %v366, %v416
      %418 = vmatmul.bf16.gmra.mxu0 %v385
      %v419 = vpop.f32.mrf.mxu0
      %v420 = vadd.f32 %v366, %v419
      %v421 = vpop.f32.mrf.mxu0
      %v422 = vadd.f32 %v366, %v421
      %423 = vmatmul.bf16.gmra.mxu0 %v388
      %v424 = vpop.f32.mrf.mxu0
      %v425 = vadd.f32 %v366, %v424
      %v426 = vpop.f32.mrf.mxu0
      %v427 = vadd.f32 %v366, %v426
      %428 = vmatmul.bf16.gmra.mxu0 %v391
      %v429 = vpop.f32.mrf.mxu0
      %v430 = vadd.f32 %v366, %v429
      %v431 = vpop.f32.mrf.mxu0
      %v432 = vadd.f32 %v366, %v431
      %433 = vmatmul.bf16.gmra.mxu0 %v394
      %v434 = vpop.f32.mrf.mxu0
      %v435 = vadd.f32 %v366, %v434
      %v436 = vpop.f32.mrf.mxu0
      %v437 = vadd.f32 %v366, %v436
      %438 = vmatmul.bf16.gmra.mxu0 %v397
      %v439 = vpop.f32.mrf.mxu0
      %v440 = vadd.f32 %v366, %v439
      %v441 = vpop.f32.mrf.mxu0
      %v442 = vadd.f32 %v366, %v441
      %443 = vmatmul.bf16.gmra.mxu0 %v400
      %v444 = vpop.f32.mrf.mxu0
      %v445 = vadd.f32 %v366, %v444
      %v446 = vpop.f32.mrf.mxu0
      %v447 = vadd.f32 %v366, %v446
      %448 = vmatmul.bf16.gmra.mxu0 %v403
      %v449 = vpop.f32.mrf.mxu0
      %v450 = vadd.f32 %v366, %v449
      %v451 = vpop.f32.mrf.mxu0
      %v452 = vadd.f32 %v366, %v451
      %453 = vdwg.mxu0
      %454 = vst [vmem:[%s226] sm:$0xff] %v415
      %455 = vst [vmem:[%s226 + $0x8] sm:$0xff] %v417
      %456 = vst [vmem:[%s226 + $0x10] sm:$0xff] %v420
      %457 = vst [vmem:[%s226 + $0x18] sm:$0xff] %v422
      %458 = vst [vmem:[%s226 + $0x20] sm:$0xff] %v425
      %459 = vst [vmem:[%s226 + $0x28] sm:$0xff] %v427
      %460 = vst [vmem:[%s226 + $0x30] sm:$0xff] %v430
      %461 = vst [vmem:[%s226 + $0x38] sm:$0xff] %v432
      %462 = vst [vmem:[%s226 + $0x40] sm:$0xff] %v435
      %463 = vst [vmem:[%s226 + $0x48] sm:$0xff] %v437
      %464 = vst [vmem:[%s226 + $0x50] sm:$0xff] %v440
      %465 = vst [vmem:[%s226 + $0x58] sm:$0xff] %v442
      %466 = vst [vmem:[%s226 + $0x60] sm:$0xff] %v445
      %467 = vst [vmem:[%s226 + $0x68] sm:$0xff] %v447
      %468 = vst [vmem:[%s226 + $0x70] sm:$0xff] %v450
      %469 = vst [vmem:[%s226 + $0x78] sm:$0xff] %v452
      %s470 = smul.u32 16, %s16
      %p471 = scmp.lt.s32.totalorder %s470, 31
      %s472 = scalar_select %p471, %s470, 31
      %s473 = smul.addr %s472, 8
      %s474 = scalar_lea.vmem %s5, %s473
      // Predicated region
      $region41: #{two_layer_net.1} parent=39 // pred_check
        %p475 = pneg %p144
      $region42: #{two_layer_net.1} parent=39 // pred_check_branch
        %477 = sbr.rel (%p475) target = $region44
      $region43: #{two_layer_net.1} parent=39 // pred_region
        %s478 = smul.u32 16, %s16
      $region44: #{two_layer_net.1} parent=39 // pred_fallthru
        _
    $region40: #{two_layer_net.1} parent=5 // pred_fallthru
      _
    %p479 = scmp.le.s32.totalorder 2, %s11
    // Predicated region
    $region45: #{two_layer_net.1} parent=5 // pred_check
      %p480 = pneg %p479
    $region46: #{two_layer_net.1} parent=5 // pred_check_branch
      %482 = sbr.rel (%p480) target = $region48
    $region47: #{two_layer_net.1} parent=5 // pred_region
      %s483 = ssub.s32 %s11, 2
      // Predicated region
      $region49: #{two_layer_net.1} parent=47 // pred_check
        %p484 = pneg %p150
      $region50: #{two_layer_net.1} parent=47 // pred_check_branch
        %486 = sbr.rel (%p484) target = $region52
      $region51: #{two_layer_net.1} parent=47 // pred_region
        %s487 = smul.u32 16, %s17
        %p488 = scmp.lt.s32.totalorder %s487, 31
        %s489 = scalar_select %p488, %s487, 31
        %s490 = smul.addr %s489, 8
        %s491 = scalar_lea.vmem %s5, %s490
      $region52: #{two_layer_net.1} parent=47 // pred_fallthru
        _
    $region48: #{two_layer_net.1} parent=5 // pred_fallthru
      _
  $region6: #{two_layer_net.1} parent=0 // loop_footer
    %s15 = sadd.s32 1, %s11
  $region7: #{two_layer_net.1} parent=0 // loop_footer_branch
    %10 = sbr.rel target = $region3
  $region8: #{two_layer_net.1} parent=0 // loop_exit
    _

</llo_original>
